<compile_context>
chip_gen: v6e
topology: v6e:2x2x1
jax: 0.10.0
libtpu: 0.0.40
codegen_flags: <defaults>
</compile_context>

<pallas_src>
import jax
import jax.numpy as jnp
from jax.experimental import pallas as pl
from jax.experimental.pallas import tpu as pltpu


def _accuracy_kernel(cm_ref, out_ref):
    # cm_ref: SMEM (4,) int32, ravel order [tn, fp, fn, tp]
    # out_ref: SMEM (1,) float32 accuracy
    tn = cm_ref[0].astype(jnp.float32)
    fp = cm_ref[1].astype(jnp.float32)
    fn = cm_ref[2].astype(jnp.float32)
    tp = cm_ref[3].astype(jnp.float32)
    correct = tn + tp
    total = tn + fp + fn + tp
    out_ref[0] = correct / total


def bi_cls_accuracy(confusion_matrix: jax.Array) -> jax.Array:
    """Binary classification accuracy computed in a Pallas TPU kernel.

    Args:
        confusion_matrix: array with 4 integer counts; ravel order
            [tn, fp, fn, tp] (e.g. a (2, 2) sklearn confusion matrix).
            Prefer int32 to avoid an extra convert op outside the kernel.

    Returns:
        (1,) float32 array holding (tn + tp) / (tn + fp + fn + tp).
    """
    cm = jnp.ravel(confusion_matrix)
    if cm.dtype != jnp.int32:
        # Only emitted when the producer hands us a non-int32 matrix.
        cm = cm.astype(jnp.int32)
    return pl.pallas_call(
        _accuracy_kernel,
        out_shape=jax.ShapeDtypeStruct((1,), jnp.float32),
        in_specs=[pl.BlockSpec(memory_space=pltpu.MemorySpace.SMEM)],
        out_specs=pl.BlockSpec(memory_space=pltpu.MemorySpace.SMEM),
        # Near-zero cost hint: 4 casts-worth of adds + 1 divide, 20 bytes I/O.
        cost_estimate=pl.CostEstimate(flops=5, transcendentals=0,
                                      bytes_accessed=20),
    )(cm)


if __name__ == "__main__":
    key = jax.random.PRNGKey(0)

    # Deterministic synthetic 2x2 confusion matrix of counts.
    cm = jax.random.randint(key, (2, 2), minval=0, maxval=100, dtype=jnp.int32)

    out = bi_cls_accuracy(cm)
    jax.block_until_ready(out)

    # Reference check mirroring the PyTorch module semantics.
    tn, fp, fn, tp = [int(v) for v in jnp.ravel(cm)]
    expected = (tn + tp) / (tn + fp + fn + tp)
    assert abs(float(out[0]) - expected) < 1e-6, (float(out[0]), expected)

    # Also check a hand-written case.
    cm_fixed = jnp.array([[40, 10], [5, 45]], dtype=jnp.int32)  # tn=40 fp=10 fn=5 tp=45
    out_fixed = bi_cls_accuracy(cm_fixed)
    jax.block_until_ready(out_fixed)
    assert abs(float(out_fixed[0]) - 0.85) < 1e-6, float(out_fixed[0])

    print("KERNEL_OK")
</pallas_src>

<mosaic_0001>
module attributes {stable_mosaic.version = 11 : i64} {
  func.func @_accuracy_kernel(%arg0: memref<4xi32, #tpu.memory_space<smem>>, %arg1: memref<1xf32, #tpu.memory_space<smem>>) attributes {dimension_semantics = [], scalar_prefetch = 0 : i64, scratch_operands = 0 : i64, tpu.core_type = #tpu.core_type<tc>} {
    %c0 = arith.constant 0 : index
    %0 = memref.load %arg0[%c0] : memref<4xi32, #tpu.memory_space<smem>>
    %1 = arith.sitofp %0 : i32 to f32
    %c1 = arith.constant 1 : index
    %2 = memref.load %arg0[%c1] : memref<4xi32, #tpu.memory_space<smem>>
    %3 = arith.sitofp %2 : i32 to f32
    %c2 = arith.constant 2 : index
    %4 = memref.load %arg0[%c2] : memref<4xi32, #tpu.memory_space<smem>>
    %5 = arith.sitofp %4 : i32 to f32
    %c3 = arith.constant 3 : index
    %6 = memref.load %arg0[%c3] : memref<4xi32, #tpu.memory_space<smem>>
    %7 = arith.sitofp %6 : i32 to f32
    %8 = arith.addf %1, %7 : f32
    %9 = arith.addf %1, %3 : f32
    %10 = arith.addf %9, %5 : f32
    %11 = arith.addf %10, %7 : f32
    %12 = arith.divf %8, %11 : f32
    %c0_0 = arith.constant 0 : index
    %13 = memref.load %arg1[%c0_0] : memref<1xf32, #tpu.memory_space<smem>>
    memref.store %12, %arg1[%c0_0] : memref<1xf32, #tpu.memory_space<smem>>
    return
  }
}

</mosaic_0001>

<llo_original>
// kernel: tpu_custom_call.1
$region0: #{tpu_custom_call.1}
  #allocation0 [shape = 'u32[]', space=smem, size = 0x4, offset = 0x4, fixed_abs, tag = 'smem constant byte address 0x4 - core index']
  #allocation1 [shape = 'u32[144,128]{1,0:T(1,128)}', space=vmem, size = 0x12000, scoped, tag = 'internal scratch']
  %s0 = inlined_call_operand.hbm [shape: s32[4], index: 0, kind: input, shape index: {}]
  %s1 = inlined_call_operand.hbm [shape: f32[1], index: 1, kind: output, shape index: {}]
  %s2 = sld [smem:[#allocation0]]
  $region18: #{tpu_custom_call.1} parent=0
    _
  %s4 = ssub.s32 1, %s2
  %s5 = scalar_select 0, %s4, %s2
  $region1: #{tpu_custom_call.1} parent=0
    #allocation2 [shape = 'u8[512]{0}', space=smem, size = 0x200, scoped, tag = 'input window, operand 0, single buffered']
    #allocation3 [shape = 's32[1]{0}', space=sflag, size = 0x4, scoped, tag = 'scoped memory for tpu_custom_call.1']
    #allocation4 [shape = 's32[1]{0}', space=sflag, size = 0x4, scoped, tag = 'scoped memory for tpu_custom_call.1']
    #allocation5 [shape = 'u8[512]{0}', space=smem, size = 0x200, scoped, tag = 'output window, operand 0, single buffered']
    %6 = vsyncpa [#allocation3], 0
    %7 = vsyncpa [#allocation4], 0
    // Predicated region
    $region2: #{tpu_custom_call.1} parent=1 // pred_check
      _
    $region3: #{tpu_custom_call.1} parent=1 // pred_check_branch
      %9 = sbr.rel (0) target = $region5
    $region4: #{tpu_custom_call.1} parent=1 // pred_region
      %s11 = ssub.s32 16, 16
      %12 = vsyncadd [#allocation3], %s11
      %15 = dma.hbm_to_smem %s0, 16, [#allocation2], [#allocation3]
    $region5: #{tpu_custom_call.1} parent=1 // pred_fallthru
      _
    // Predicated region
    $region6: #{tpu_custom_call.1} parent=1 // pred_check
      _
    $region7: #{tpu_custom_call.1} parent=1 // pred_check_branch
      %17 = sbr.rel (0) target = $region9
    $region8: #{tpu_custom_call.1} parent=1 // pred_region
      %18 = dma.done [#allocation3], 16
    $region9: #{tpu_custom_call.1} parent=1 // pred_fallthru
      _
    %19 = sfence
    %s20 = sld [smem:[#allocation2]]
    %s21 = scvt.s32.f32 %s20
    %s22 = sld [smem:[#allocation2 + $0x1]]
    %s23 = scvt.s32.f32 %s22
    %s24 = sld [smem:[#allocation2 + $0x2]]
    %s25 = scvt.s32.f32 %s24
    %s26 = sld [smem:[#allocation2 + $0x3]]
    %s27 = scvt.s32.f32 %s26
    %s28 = sadd.f32 %s21, %s27
    %s29 = sadd.f32 %s21, %s23
    %s30 = sadd.f32 %s29, %s25
    %s31 = sadd.f32 %s30, %s27
    %v32 = vstv %s31
    %v33 = vrcp.pop %v32
    %s34 = vtos %v33
    %s35 = smul.f32 %s28, %s34
    %s36 = scalar_lea.smem [#allocation5], 0
    %37 = sst [smem:[%s36]] %s35
    // Predicated region
    $region10: #{tpu_custom_call.1} parent=1 // pred_check
      _
    $region11: #{tpu_custom_call.1} parent=1 // pred_check_branch
      %39 = sbr.rel (0) target = $region13
    $region12: #{tpu_custom_call.1} parent=1 // pred_region
      %s41 = ssub.s32 16, 16
      %42 = vsyncadd [#allocation4], %s41
      %45 = dma.smem_to_hbm [#allocation5], 16, %s1, [#allocation4]
    $region13: #{tpu_custom_call.1} parent=1 // pred_fallthru
      _
    // Predicated region
    $region14: #{tpu_custom_call.1} parent=1 // pred_check
      _
    $region15: #{tpu_custom_call.1} parent=1 // pred_check_branch
      %47 = sbr.rel (0) target = $region17
    $region16: #{tpu_custom_call.1} parent=1 // pred_region
      %48 = dma.done [#allocation4], 16
    $region17: #{tpu_custom_call.1} parent=1 // pred_fallthru
      _
    %49 = sfence
    %50 = vsyncpa [#allocation3], 1
    %51 = vsyncpa [#allocation4], 1

</llo_original>
